<compile_context>
chip_gen: v6e
topology: v6e:2x2x1
jax: 0.10.0
libtpu: 0.0.40
codegen_flags: <defaults>
</compile_context>

<pallas_src>
import functools

import jax
import jax.numpy as jnp
from jax.experimental import pallas as pl
from jax.experimental.pallas import tpu as pltpu


def _round_up(n, m):
    return ((n + m - 1) // m) * m


def _cdiv(a, b):
    return -(-a // b)


# ---------------------------------------------------------------------------
# grad_reverse: identity forward, -lambd * g backward (matches GradReverse).
# ---------------------------------------------------------------------------
@functools.partial(jax.custom_vjp, nondiff_argnums=(1,))
def _grad_reverse(x, lambd=1.0):
    return x


def _grad_reverse_fwd(x, lambd):
    return x, None


def _grad_reverse_bwd(lambd, _, g):
    return (-lambd * g,)


_grad_reverse.defvjp(_grad_reverse_fwd, _grad_reverse_bwd)


# ---------------------------------------------------------------------------
# Pallas kernel: one (TM, U) x-tile against the resident (U, C_pad) weight.
# Single K step: one MXU dot + bias add + lane-dense store per batch tile.
# ---------------------------------------------------------------------------
def _linear_kernel(x_ref, w_ref, b_ref, o_ref):
    x = x_ref[...]
    if x.dtype != w_ref.dtype:
        x = x.astype(w_ref.dtype)            # f32 -> bf16 cast in-kernel (VPU)
    acc = jnp.dot(x, w_ref[...], preferred_element_type=jnp.float32)
    o_ref[...] = (acc + b_ref[...]).astype(o_ref.dtype)


# ---------------------------------------------------------------------------
# Batch-tile selection.
# ---------------------------------------------------------------------------
def _pick_tm(B, tm_cap, need_bytes, budget, min_tiles):
    """Pick a batch tile: multiple of 8, within the VMEM budget, preferring a
    tile that divides B exactly (no batch-pad copy) and yielding >= min_tiles
    grid tiles."""
    upper = max(8, min(tm_cap, _round_up(B, 8)))
    if min_tiles > 1:
        upper = max(8, min(upper, _round_up(_cdiv(B, min_tiles), 8)))

    # Prefer an exact divisor of B (no padding of x at all), largest first.
    t = upper - (upper % 8)
    while t >= 8:
        if B % t == 0 and need_bytes(t) <= budget:
            return t
        t -= 8

    # Fall back: padded last tile, largest multiple of 8 within budget.
    t = upper
    while t > 8 and need_bytes(t) > budget:
        t = max(8, _round_up(t // 2, 8))
    num_m = max(min_tiles, _cdiv(B, t))
    return max(8, _round_up(_cdiv(B, num_m), 8))


# ---------------------------------------------------------------------------
# pallas_call wrapper for the linear layer (forward implementation).
# ---------------------------------------------------------------------------
def _linear_impl(x, weight, bias, cfg):
    tm_cap, use_bf16, vmem_limit_bytes, budget = cfg

    B, U = x.shape
    C = weight.shape[0]
    out_dtype = x.dtype
    w_dtype = jnp.bfloat16 if use_bf16 else weight.dtype

    C_pad = _round_up(C, 128)                 # lane-dense (unmasked) stores

    x_size = jnp.dtype(x.dtype).itemsize
    w_size = jnp.dtype(w_dtype).itemsize
    o_size = jnp.dtype(out_dtype).itemsize

    def need_bytes(t):
        # x double buffer + resident weight (double-buffered by default)
        # + bias + output double buffer.
        return (2 * t * U * x_size
                + 2 * U * C_pad * w_size
                + 2 * C_pad * 4
                + 2 * t * C_pad * o_size)

    min_tiles = 2 if B >= 32 else 1           # keep both v7x TCs busy
    TM = _pick_tm(B, tm_cap, need_bytes, budget, min_tiles)
    num_m = _cdiv(B, TM)
    B_pad = num_m * TM

    # Weight / bias prep (tiny arrays): pad classes to 128, transpose to
    # (U, C_pad) so the dot is in natural MXU orientation, cast to bf16.
    wp = weight
    bp = bias
    if C_pad != C:
        wp = jnp.pad(weight, ((0, C_pad - C), (0, 0)))
        bp = jnp.pad(bias, (0, C_pad - C))
    wp = wp.T.astype(w_dtype)                 # (U, C_pad)
    bp = bp.reshape(1, C_pad).astype(jnp.float32)

    # x: no dtype conversion, no K padding; batch padding only if unavoidable.
    xp = x if B_pad == B else jnp.pad(x, ((0, B_pad - B), (0, 0)))

    if vmem_limit_bytes is None:
        vmem_limit_bytes = int(min(max(2 * need_bytes(TM), 24 << 20), 56 << 20))

    cost = pl.CostEstimate(
        flops=2 * B_pad * U * C_pad,
        transcendentals=0,
        bytes_accessed=(B_pad * U * x_size        # x streamed once
                        + U * C_pad * w_size      # weight fetched once (resident)
                        + C_pad * 4
                        + B_pad * C_pad * o_size))

    out = pl.pallas_call(
        _linear_kernel,
        out_shape=jax.ShapeDtypeStruct((B_pad, C_pad), out_dtype),
        grid_spec=pltpu.PrefetchScalarGridSpec(
            num_scalar_prefetch=0,
            grid=(num_m,),
            in_specs=[
                pl.BlockSpec((TM, U), lambda i: (i, 0)),     # x tile (orig dtype)
                pl.BlockSpec((U, C_pad), lambda i: (0, 0)),  # resident weight
                pl.BlockSpec((1, C_pad), lambda i: (0, 0)),  # resident bias
            ],
            out_specs=pl.BlockSpec((TM, C_pad), lambda i: (i, 0)),
        ),
        compiler_params=pltpu.CompilerParams(
            dimension_semantics=("parallel",),
            vmem_limit_bytes=vmem_limit_bytes),
        cost_estimate=cost,
    )(xp, wp, bp)

    if B_pad != B or C_pad != C:
        out = out[:B, :C]
    return out


# custom_vjp so training (backprop through the Pallas forward) works.
@functools.partial(jax.custom_vjp, nondiff_argnums=(3,))
def _linear(x, weight, bias, cfg):
    return _linear_impl(x, weight, bias, cfg)


def _linear_vjp_fwd(x, weight, bias, cfg):
    return _linear_impl(x, weight, bias, cfg), (x, weight)


def _linear_vjp_bwd(cfg, res, g):
    x, weight = res
    g32 = g.astype(jnp.float32)
    dx = (g32 @ weight.astype(jnp.float32)).astype(x.dtype)
    dw = (g32.T @ x.astype(jnp.float32)).astype(weight.dtype)
    db = jnp.sum(g32, axis=0).astype(weight.dtype)
    return dx, dw, db


_linear.defvjp(_linear_vjp_fwd, _linear_vjp_bwd)


# ---------------------------------------------------------------------------
# Public wrapper = ResClassifier.forward
# ---------------------------------------------------------------------------
def res_classifier_forward(x, weight, bias, *, reverse=False, lambd=1.0,
                           tm=1024, use_bf16=True, vmem_limit_bytes=None,
                           vmem_tile_budget_bytes=24 << 20):
    """out = (grad_reverse?(x)) @ weight.T + bias

    Args:
      x:      (B, unit_size) float32
      weight: (num_classes, unit_size) float32  (PyTorch nn.Linear layout)
      bias:   (num_classes,) float32
      reverse: apply grad_reverse (identity fwd, gradient * -lambd in bwd).
      tm:      upper bound on the batch tile (actual tile is budget/shape aware).
      use_bf16: cast x (in-kernel) and weight to bf16 for the MXU; accumulation
        and bias add stay f32.  Documented deviation: logits differ from the
        f32 PyTorch reference by ~1e-2 relative; set use_bf16=False for exact.
    Returns:
      (B, num_classes) array with x.dtype.
    """
    if reverse:
        x = _grad_reverse(x, lambd)
    cfg = (int(tm), bool(use_bf16),
           None if vmem_limit_bytes is None else int(vmem_limit_bytes),
           int(vmem_tile_budget_bytes))
    return _linear(x, weight, bias, cfg)


if __name__ == "__main__":
    key = jax.random.PRNGKey(0)
    k1, k2, k3, k4, k5 = jax.random.split(key, 5)

    # --- Test 1: small aligned shapes (Linear(unit_size -> num_classes)).
    B, U, C = 8, 256, 12
    bound = 1.0 / (U ** 0.5)
    w = jax.random.uniform(k1, (C, U), jnp.float32, minval=-bound, maxval=bound)
    b = jax.random.uniform(k2, (C,), jnp.float32, minval=-bound, maxval=bound)
    x = jax.random.normal(k3, (B, U), jnp.float32)
    ref = x @ w.T + b

    out_bf16 = jax.block_until_ready(res_classifier_forward(x, w, b))
    out_f32 = jax.block_until_ready(
        res_classifier_forward(x, w, b, use_bf16=False))
    out_rev = jax.block_until_ready(
        res_classifier_forward(x, w, b, reverse=True, lambd=0.5))

    assert out_bf16.shape == (B, C)
    assert jnp.allclose(out_bf16, ref, atol=5e-2, rtol=5e-2)
    assert jnp.allclose(out_f32, ref, atol=1e-3, rtol=1e-3)
    # reverse=True is identity in the forward pass.
    assert jnp.allclose(out_rev, out_bf16, atol=1e-6, rtol=1e-6)

    # --- Test 2: module defaults -- ragged batch, unit_size=1000 (unaligned K).
    B2, U2, C2 = 10, 1000, 12
    bound2 = 1.0 / (U2 ** 0.5)
    w2 = jax.random.uniform(k4, (C2, U2), jnp.float32,
                            minval=-bound2, maxval=bound2)
    b2 = jax.random.uniform(k5, (C2,), jnp.float32,
                            minval=-bound2, maxval=bound2)
    x2 = jax.random.normal(k3, (B2, U2), jnp.float32)
    ref2 = x2 @ w2.T + b2

    out2 = jax.block_until_ready(res_classifier_forward(x2, w2, b2))
    assert out2.shape == (B2, C2)
    assert jnp.allclose(out2, ref2, atol=5e-2, rtol=5e-2)

    # --- Test 3: gradient flows through the Pallas call + grad_reverse flip.
    def loss(xx):
        return jnp.sum(res_classifier_forward(xx, w2, b2, reverse=True,
                                               lambd=0.5))

    gx = jax.block_until_ready(jax.grad(loss)(x2))
    ref_gx = jnp.broadcast_to(-0.5 * jnp.sum(w2, axis=0), x2.shape)
    assert jnp.allclose(gx, ref_gx, atol=1e-5, rtol=1e-5)

    print("KERNEL_OK")
</pallas_src>

<mosaic_0001>
module attributes {stable_mosaic.version = 11 : i64} {
  func.func @_linear_kernel(%arg0: i32, %arg1: memref<8x256xf32, #tpu.memory_space<vmem>>, %arg2: memref<256x128xbf16, #tpu.memory_space<vmem>>, %arg3: memref<1x128xf32, #tpu.memory_space<vmem>>, %arg4: memref<8x128xf32, #tpu.memory_space<vmem>>) attributes {dimension_semantics = [#tpu.dimension_semantics<parallel>], iteration_bounds = array<i64: 1>, scalar_prefetch = 0 : i64, scratch_operands = 0 : i64, tpu.core_type = #tpu.core_type<tc>, window_params = [{transform_indices = @transform_0, window_bounds = array<i64: 8, 256>}, {pipeline_mode = #tpu.pipeline_mode<synchronous>, transform_indices = @transform_1, window_bounds = array<i64: 256, 128>}, {pipeline_mode = #tpu.pipeline_mode<synchronous>, transform_indices = @transform_2, window_bounds = array<i64: 1, 128>}, {transform_indices = @transform_3, window_bounds = array<i64: 8, 128>}]} {
    %c0 = arith.constant 0 : index
    %c0_0 = arith.constant 0 : index
    %0 = vector.load %arg1[%c0, %c0_0] : memref<8x256xf32, #tpu.memory_space<vmem>>, vector<8x256xf32>
    %1 = arith.truncf %0 : vector<8x256xf32> to vector<8x256xbf16>
    %c0_1 = arith.constant 0 : index
    %c0_2 = arith.constant 0 : index
    %2 = vector.load %arg2[%c0_1, %c0_2] : memref<256x128xbf16, #tpu.memory_space<vmem>>, vector<256x128xbf16>
    %cst = arith.constant dense<0.000000e+00> : vector<8x128xf32>
    %3 = tpu.matmul %1, %2, %cst {dimension_numbers = #tpu.dot_dimension_numbers<[1], [0], [0], [1], [0, 0, 1, 1], [], []>} : vector<8x256xbf16>, vector<256x128xbf16>, vector<8x128xf32> -> vector<8x128xf32>
    %c0_3 = arith.constant 0 : index
    %c0_4 = arith.constant 0 : index
    %4 = vector.load %arg3[%c0_3, %c0_4] : memref<1x128xf32, #tpu.memory_space<vmem>>, vector<1x128xf32>
    %5 = vector.broadcast %4 : vector<1x128xf32> to vector<8x128xf32>
    %6 = arith.addf %3, %5 : vector<8x128xf32>
    %c0_5 = arith.constant 0 : index
    %c0_6 = arith.constant 0 : index
    %7 = vector.load %arg4[%c0_5, %c0_6] : memref<8x128xf32, #tpu.memory_space<vmem>>, vector<8x128xf32>
    tpu.vector_store %arg4[%c0_5, %c0_6], %6 {strides = array<i32>} : memref<8x128xf32, #tpu.memory_space<vmem>>, vector<8x128xf32>,
    return
  }
  func.func @transform_0(%arg0: i32) -> (i32, i32) {
    %c0_i32 = arith.constant 0 : i32
    %c0_i32_0 = arith.constant 0 : i32
    return %arg0, %c0_i32 : i32, i32
  }
  func.func @transform_1(%arg0: i32) -> (i32, i32) {
    %c0_i32 = arith.constant 0 : i32
    %c0_i32_0 = arith.constant 0 : i32
    %c0_i32_1 = arith.constant 0 : i32
    return %c0_i32, %c0_i32_0 : i32, i32
  }
  func.func @transform_2(%arg0: i32) -> (i32, i32) {
    %c0_i32 = arith.constant 0 : i32
    %c0_i32_0 = arith.constant 0 : i32
    %c0_i32_1 = arith.constant 0 : i32
    return %c0_i32, %c0_i32_0 : i32, i32
  }
  func.func @transform_3(%arg0: i32) -> (i32, i32) {
    %c0_i32 = arith.constant 0 : i32
    %c0_i32_0 = arith.constant 0 : i32
    return %arg0, %c0_i32 : i32, i32
  }
}

</mosaic_0001>

<llo_original>
// kernel: tpu_custom_call.1
$region0: #{tpu_custom_call.1}
  #allocation0 [shape = 'u32[]', space=smem, size = 0x4, offset = 0x4, fixed_abs, tag = 'smem constant byte address 0x4 - core index']
  #allocation1 [shape = 'u32[144,128]{1,0:T(1,128)}', space=vmem, size = 0x12000, scoped, tag = 'internal scratch']
  %s0 = inlined_call_operand.hbm [shape: f32[8,256], index: 0, kind: input, shape index: {}]
  %s1 = inlined_call_operand.hbm [shape: bf16[256,128], index: 1, kind: input, shape index: {}]
  %s2 = inlined_call_operand.vmem [shape: f32[1,128], index: 2, kind: input, shape index: {}]
  %s3 = inlined_call_operand.hbm [shape: f32[8,128], index: 3, kind: output, shape index: {}]
  %s4 = sld [smem:[#allocation0]]
  $region30: #{tpu_custom_call.1} parent=0
    _
  %s6 = ssub.s32 1, %s4
  %s7 = scalar_select 0, %s6, %s4
  $region1: #{tpu_custom_call.1} parent=0
    #allocation2 [shape = 'u8[8192]{0}', space=vmem, size = 0x2000, scoped, tag = 'input window, operand 0, single buffered']
    #allocation3 [shape = 's32[1]{0}', space=sflag, size = 0x4, scoped, tag = 'scoped memory for tpu_custom_call.1']
    #allocation4 [shape = 's32[1]{0}', space=sflag, size = 0x4, scoped, tag = 'scoped memory for tpu_custom_call.1']
    #allocation5 [shape = 'u8[65536]{0}', space=vmem, size = 0x10000, scoped, tag = 'input window, operand 1, single buffered']
    #allocation6 [shape = 's32[1]{0}', space=sflag, size = 0x4, scoped, tag = 'scoped memory for tpu_custom_call.1']
    #allocation7 [shape = 'u8[4096]{0}', space=vmem, size = 0x1000, scoped, tag = 'output window, operand 0, single buffered']
    %8 = vsyncpa [#allocation3], 0
    %9 = vsyncpa [#allocation6], 0
    %10 = vsyncpa [#allocation4], 0
    // Predicated region
    $region2: #{tpu_custom_call.1} parent=1 // pred_check
      _
    $region3: #{tpu_custom_call.1} parent=1 // pred_check_branch
      %12 = sbr.rel (0) target = $region5
    $region4: #{tpu_custom_call.1} parent=1 // pred_region
      %s14 = ssub.s32 256, 256
      %15 = vsyncadd [#allocation3], %s14
      %s17 = sshll.u32 [#allocation2], 4
      %s18 = int_to_ptr.vmem [resolvable:$true] %s17
      %20 = dma.hbm_to_vmem [thread:$0]  %s0, 256, %s18, [#allocation3]
    $region5: #{tpu_custom_call.1} parent=1 // pred_fallthru
      _
    // Predicated region
    $region6: #{tpu_custom_call.1} parent=1 // pred_check
      _
    $region7: #{tpu_custom_call.1} parent=1 // pred_check_branch
      %22 = sbr.rel (0) target = $region9
    $region8: #{tpu_custom_call.1} parent=1 // pred_region
      %s24 = ssub.s32 2048, 2048
      %25 = vsyncadd [#allocation6], %s24
      %s26 = sshll.u32 [#allocation5], 4
      %s27 = int_to_ptr.vmem [resolvable:$true] %s26
      %32 = dma.hbm_to_vmem [thread:$0]  %s1, 2048, %s27, [#allocation6], 64, 64, 4
    $region9: #{tpu_custom_call.1} parent=1 // pred_fallthru
      _
    // Predicated region
    $region10: #{tpu_custom_call.1} parent=1 // pred_check
      _
    $region11: #{tpu_custom_call.1} parent=1 // pred_check_branch
      %34 = sbr.rel (0) target = $region13
    $region12: #{tpu_custom_call.1} parent=1 // pred_region
      _
    $region13: #{tpu_custom_call.1} parent=1 // pred_fallthru
      _
    // Predicated region
    $region14: #{tpu_custom_call.1} parent=1 // pred_check
      _
    $region15: #{tpu_custom_call.1} parent=1 // pred_check_branch
      %36 = sbr.rel (0) target = $region17
    $region16: #{tpu_custom_call.1} parent=1 // pred_region
      %37 = dma.done [#allocation3], 256
    $region17: #{tpu_custom_call.1} parent=1 // pred_fallthru
      _
    // Predicated region
    $region18: #{tpu_custom_call.1} parent=1 // pred_check
      _
    $region19: #{tpu_custom_call.1} parent=1 // pred_check_branch
      %39 = sbr.rel (0) target = $region21
    $region20: #{tpu_custom_call.1} parent=1 // pred_region
      %40 = dma.done [#allocation6], 2048
    $region21: #{tpu_custom_call.1} parent=1 // pred_fallthru
      _
    %v42 = vld [vmem:[#allocation2] sm:$0xff]
    %v43 = vld [vmem:[#allocation2 + $0x8] sm:$0xff]
    %v44 = vpack.c.bf16 %v42, %v42
    %v45 = vpack.c.bf16 %v43, %v43
    %v46 = vld [vmem:[#allocation5] sm:$0xf]
    %v47 = vld [vmem:[#allocation5 + $0x4] sm:$0xf]
    %v48 = vld [vmem:[#allocation5 + $0x8] sm:$0xf]
    %v49 = vld [vmem:[#allocation5 + $0xc] sm:$0xf]
    %v50 = vld [vmem:[#allocation5 + $0x10] sm:$0xf]
    %v51 = vld [vmem:[#allocation5 + $0x14] sm:$0xf]
    %v52 = vld [vmem:[#allocation5 + $0x18] sm:$0xf]
    %v53 = vld [vmem:[#allocation5 + $0x1c] sm:$0xf]
    %v54 = vld [vmem:[#allocation5 + $0x20] sm:$0xf]
    %v55 = vld [vmem:[#allocation5 + $0x24] sm:$0xf]
    %v56 = vld [vmem:[#allocation5 + $0x28] sm:$0xf]
    %v57 = vld [vmem:[#allocation5 + $0x2c] sm:$0xf]
    %v58 = vld [vmem:[#allocation5 + $0x30] sm:$0xf]
    %v59 = vld [vmem:[#allocation5 + $0x34] sm:$0xf]
    %v60 = vld [vmem:[#allocation5 + $0x38] sm:$0xf]
    %v61 = vld [vmem:[#allocation5 + $0x3c] sm:$0xf]
    %v62 = vld [vmem:[#allocation5 + $0x40] sm:$0xf]
    %v63 = vld [vmem:[#allocation5 + $0x44] sm:$0xf]
    %v64 = vld [vmem:[#allocation5 + $0x48] sm:$0xf]
    %v65 = vld [vmem:[#allocation5 + $0x4c] sm:$0xf]
    %v66 = vld [vmem:[#allocation5 + $0x50] sm:$0xf]
    %v67 = vld [vmem:[#allocation5 + $0x54] sm:$0xf]
    %v68 = vld [vmem:[#allocation5 + $0x58] sm:$0xf]
    %v69 = vld [vmem:[#allocation5 + $0x5c] sm:$0xf]
    %v70 = vld [vmem:[#allocation5 + $0x60] sm:$0xf]
    %v71 = vld [vmem:[#allocation5 + $0x64] sm:$0xf]
    %v72 = vld [vmem:[#allocation5 + $0x68] sm:$0xf]
    %v73 = vld [vmem:[#allocation5 + $0x6c] sm:$0xf]
    %v74 = vld [vmem:[#allocation5 + $0x70] sm:$0xf]
    %v75 = vld [vmem:[#allocation5 + $0x74] sm:$0xf]
    %v76 = vld [vmem:[#allocation5 + $0x78] sm:$0xf]
    %v77 = vld [vmem:[#allocation5 + $0x7c] sm:$0xf]
    %v78 = vld [vmem:[%s2] sm:$0x1]
    %v80 = vlaneseq
    %v81 = vshrl.u32 %v80, 7
    %v82 = vsub.s32 0, %v81
    %v83 = vrot.slane %v78, %v82
    %v117 = vunpack.c.l.b16 %v46
    %v118 = vunpack.c.l.b16 %v47
    %v119 = vunpack.c.l.b16 %v48
    %v120 = vunpack.c.l.b16 %v49
    %v121 = vunpack.c.l.b16 %v50
    %v122 = vunpack.c.l.b16 %v51
    %v123 = vunpack.c.l.b16 %v52
    %v124 = vunpack.c.l.b16 %v53
    %v125 = vunpack.c.l.b16 %v54
    %v126 = vunpack.c.l.b16 %v55
    %v127 = vunpack.c.l.b16 %v56
    %v128 = vunpack.c.l.b16 %v57
    %v129 = vunpack.c.l.b16 %v58
    %v130 = vunpack.c.l.b16 %v59
    %v131 = vunpack.c.l.b16 %v60
    %v132 = vunpack.c.l.b16 %v61
    %v133 = vunpack.c.l.b16 %v62
    %v134 = vunpack.c.l.b16 %v63
    %v135 = vunpack.c.l.b16 %v64
    %v136 = vunpack.c.l.b16 %v65
    %v137 = vunpack.c.l.b16 %v66
    %v138 = vunpack.c.l.b16 %v67
    %v139 = vunpack.c.l.b16 %v68
    %v140 = vunpack.c.l.b16 %v69
    %v141 = vunpack.c.l.b16 %v70
    %v142 = vunpack.c.l.b16 %v71
    %v143 = vunpack.c.l.b16 %v72
    %v144 = vunpack.c.l.b16 %v73
    %v145 = vunpack.c.l.b16 %v74
    %v146 = vunpack.c.l.b16 %v75
    %v147 = vunpack.c.l.b16 %v76
    %v148 = vunpack.c.l.b16 %v77
    %v149 = vpack.c.b16 %v118, %v117
    %v150 = vpack.c.b16 %v120, %v119
    %v151 = vpack.c.b16 %v122, %v121
    %v152 = vpack.c.b16 %v124, %v123
    %v153 = vpack.c.b16 %v126, %v125
    %v154 = vpack.c.b16 %v128, %v127
    %v155 = vpack.c.b16 %v130, %v129
    %v156 = vpack.c.b16 %v132, %v131
    %v157 = vpack.c.b16 %v134, %v133
    %v158 = vpack.c.b16 %v136, %v135
    %v159 = vpack.c.b16 %v138, %v137
    %v160 = vpack.c.b16 %v140, %v139
    %v161 = vpack.c.b16 %v142, %v141
    %v162 = vpack.c.b16 %v144, %v143
    %v163 = vpack.c.b16 %v146, %v145
    %v164 = vpack.c.b16 %v148, %v147
    %181 = vmatprep.subr.bf16.mxu0 0
    %182 = vmatpush1.bf16.msra.mxu0 %v156
    %183 = vmatprep.subr.bf16.mxu0 0
    %184 = vmatpush1.bf16.msra.mxu0 %v155
    %185 = vmatprep.subr.bf16.mxu0 0
    %186 = vmatpush1.bf16.msra.mxu0 %v154
    %187 = vmatprep.subr.bf16.mxu0 0
    %188 = vmatpush1.bf16.msra.mxu0 %v153
    %189 = vmatprep.subr.bf16.mxu0 0
    %190 = vmatpush1.bf16.msra.mxu0 %v152
    %191 = vmatprep.subr.bf16.mxu0 0
    %192 = vmatpush1.bf16.msra.mxu0 %v151
    %193 = vmatprep.subr.bf16.mxu0 0
    %194 = vmatpush1.bf16.msra.mxu0 %v150
    %195 = vmatprep.subr.bf16.mxu0 0
    %196 = vmatpush1.bf16.msra.mxu0 %v149
    %197 = vmatprep.subr.bf16.mxu0 0
    %198 = vmatpush2.bf16.msra.mxu0 %v164
    %199 = vmatprep.subr.bf16.mxu0 0
    %200 = vmatpush2.bf16.msra.mxu0 %v163
    %201 = vmatprep.subr.bf16.mxu0 0
    %202 = vmatpush2.bf16.msra.mxu0 %v162
    %203 = vmatprep.subr.bf16.mxu0 0
    %204 = vmatpush2.bf16.msra.mxu0 %v161
    %205 = vmatprep.subr.bf16.mxu0 0
    %206 = vmatpush2.bf16.msra.mxu0 %v160
    %207 = vmatprep.subr.bf16.mxu0 0
    %208 = vmatpush2.bf16.msra.mxu0 %v159
    %209 = vmatprep.subr.bf16.mxu0 0
    %210 = vmatpush2.bf16.msra.mxu0 %v158
    %211 = vmatprep.subr.bf16.mxu0 0
    %212 = vmatpush2.bf16.msra.mxu0 %v157
    %213 = vmatprep.mubr.bf16.mxu0 %v45
    %214 = vmatmul.mubr.bf16.gmra.mxu0 %v44
    %v215 = vpop.f32.mrf.mxu0
    %v216 = vadd.f32 %v83, %v215
    %v217 = vpop.f32.mrf.mxu0
    %v218 = vpop.f32.mrf.mxu0
    %v219 = vpop.f32.mrf.mxu0
    %220 = vdwg.mxu0
    %221 = vst [vmem:[#allocation7] sm:$0xff] %v216
    // Predicated region
    $region22: #{tpu_custom_call.1} parent=1 // pred_check
      _
    $region23: #{tpu_custom_call.1} parent=1 // pred_check_branch
      %223 = sbr.rel (0) target = $region25
    $region24: #{tpu_custom_call.1} parent=1 // pred_region
      %s225 = ssub.s32 128, 128
      %226 = vsyncadd [#allocation4], %s225
      %s228 = sshll.u32 [#allocation7], 4
      %s229 = int_to_ptr.vmem [resolvable:$true] %s228
      %231 = dma.vmem_to_hbm [thread:$0]  %s229, 128, %s3, [#allocation4]
    $region25: #{tpu_custom_call.1} parent=1 // pred_fallthru
      _
    // Predicated region
    $region26: #{tpu_custom_call.1} parent=1 // pred_check
      _
    $region27: #{tpu_custom_call.1} parent=1 // pred_check_branch
      %233 = sbr.rel (0) target = $region29
    $region28: #{tpu_custom_call.1} parent=1 // pred_region
      %234 = dma.done [#allocation4], 128
    $region29: #{tpu_custom_call.1} parent=1 // pred_fallthru
      _
    %235 = vsyncpa [#allocation3], 1
    %236 = vsyncpa [#allocation6], 1
    %237 = vsyncpa [#allocation4], 1

</llo_original>
